<compile_context>
chip_gen: v7x
topology: tpu7x:2x2x1
jax: 0.10.0
libtpu: 0.0.40
codegen_flags: <defaults>
</compile_context>

<pallas_src>
import numpy as np
import jax
import jax.numpy as jnp
from jax.experimental import pallas as pl
from jax.experimental.pallas import tpu as pltpu

POOL_OUT = 30            # AdaptiveMaxPool2d((30, 1))
NEG_INF = -1e30
KH1, KH3 = 4, 2          # conv1 / conv3 kernel heights (conv2 branch is dead)
KH_MAX = KH1
N_CH = 4                 # merged output channels: [c1_0, c1_1, c3_0, c3_1]
FEAT = N_CH * POOL_OUT   # 120 lane-dense pooled features per batch row


def cnn_kernel(xp_ref, wbig_ref, bbig_ref, mask_ref, wfc_ref, bfc_ref, o_ref):
    # xp_ref  : (N, Hpad, D)  input, channel squeezed, zero-padded by KH1-KH3 rows
    # wbig_ref: (KH1*D, 120)  merged conv weights, each channel column repeated x30
    # bbig_ref: (1, 120)      merged conv bias, repeated x30
    # mask_ref: (Lmax, 120)   0 inside pool window / -1e30 outside
    # wfc_ref : (120, 9)      fc weight (out2==out1 slab pre-folded into conv1's)
    # bfc_ref : (1, 9)
    N = o_ref.shape[0]
    Lmax = mask_ref.shape[0]
    x = xp_ref[...]
    wbig = wbig_ref[...]
    bbig = bbig_ref[...]
    mask = mask_ref[...]

    rows = []
    for n in range(N):                               # static unroll (N is tiny)
        xn = x[n]                                    # (Hpad, D)
        patches = jnp.concatenate(                   # im2col: (Lmax, KH1*D)
            [xn[k:k + Lmax, :] for k in range(KH_MAX)], axis=-1)
        conv = jnp.dot(patches, wbig,
                       preferred_element_type=jnp.float32) + bbig   # (Lmax, 120)
        z = jnp.maximum(conv, 0.0) + mask            # relu + masked pool windows
        rows.append(jnp.max(z, axis=0, keepdims=True))               # (1, 120)
    feat = jnp.concatenate(rows, axis=0)             # (N, 120), torch flatten order

    o_ref[...] = (jnp.dot(feat, wfc_ref[...],
                          preferred_element_type=jnp.float32) + bfc_ref[...])


def _pool_mask(L, Lmax):
    # PyTorch adaptive max-pool windows: [floor(p*L/P), ceil((p+1)*L/P))
    m = np.full((Lmax, POOL_OUT), NEG_INF, np.float32)
    for p in range(POOL_OUT):
        s = (p * L) // POOL_OUT
        e = -(-((p + 1) * L) // POOL_OUT)
        m[s:e, p] = 0.0
    return m


def cnn_forward(x_nchw, params):
    N, C, H, D = x_nchw.shape
    assert C == 1
    x = x_nchw[:, 0, :, :].astype(jnp.float32)               # (N, H, D)

    L1 = H - KH1 + 1                                         # conv1 positions
    L3 = H - KH3 + 1                                         # conv3 positions
    Lmax = L3
    # Zero-pad so kh=4 patches exist for all Lmax positions (the conv1 tail
    # rows t >= L1 are excluded again by the pool mask below).
    xp = jnp.pad(x, ((0, 0), (0, KH1 - KH3), (0, 0)))        # (N, H+2, D)

    # Merged conv weight (KH1*D, 4*POOL_OUT): channel order
    # [conv1 ch0, conv1 ch1, conv3 ch0, conv3 ch1]; each channel's column is
    # repeated POOL_OUT times so column index = c*30 + pool_idx, which is
    # exactly the torch channel-major flatten order of the pooled features.
    w1 = params["w1"][:, 0].reshape(2, KH1 * D).astype(jnp.float32)   # (2, 64)
    w3 = params["w3"][:, 0].reshape(2, KH3 * D).astype(jnp.float32)   # (2, 32)
    w3 = jnp.concatenate([w3, jnp.zeros((2, (KH1 - KH3) * D), jnp.float32)], axis=1)
    w_ch = jnp.concatenate([w1, w3], axis=0)                          # (4, 64)
    wbig = jnp.repeat(w_ch, POOL_OUT, axis=0).T                       # (64, 120)

    b_ch = jnp.concatenate([params["b1"], params["b3"]]).astype(jnp.float32)
    bbig = jnp.repeat(b_ch, POOL_OUT).reshape(1, FEAT)                # (1, 120)

    m1 = _pool_mask(L1, Lmax)
    m3 = _pool_mask(L3, Lmax)
    mask = jnp.asarray(np.concatenate([m1, m1, m3, m3], axis=1))      # (Lmax, 120)

    # fc: torch Linear weight (9, 180), forward = feat @ W.T + b with
    # feat = cat([out1, out2(==out1), out3]) -> fold slabs 0 and 1 host-side.
    fwT = params["fc_w"].T.astype(jnp.float32)                        # (180, 9)
    wfc = jnp.concatenate(
        [fwT[0:2 * POOL_OUT] + fwT[2 * POOL_OUT:4 * POOL_OUT],
         fwT[4 * POOL_OUT:6 * POOL_OUT]], axis=0)                     # (120, 9)
    bfc = params["fc_b"].reshape(1, 9).astype(jnp.float32)

    vmem = pl.BlockSpec(memory_space=pltpu.MemorySpace.VMEM)
    args = (xp, wbig, bbig, mask, wfc, bfc)
    return pl.pallas_call(
        cnn_kernel,
        out_shape=jax.ShapeDtypeStruct((N, 9), jnp.float32),
        in_specs=[vmem] * len(args),
        out_specs=vmem,
    )(*args)


def reference_forward(x_nchw, params):
    # Pure-JAX reference reproducing the torch module (including the
    # `out2 = out1.view(...)` bug).
    x = x_nchw[:, 0].astype(jnp.float32)                     # (N, H, D)
    N, H, D = x.shape

    def conv_relu(w, b):
        kh = w.shape[2]
        L = H - kh + 1
        wk = w[:, 0].reshape(2, kh * D)
        cols = []
        for t in range(L):
            patch = x[:, t:t + kh, :].reshape(N, kh * D)
            cols.append(patch @ wk.T + b)
        return jnp.maximum(jnp.stack(cols, axis=2), 0.0)     # (N, 2, L)

    def pool(r):
        L = r.shape[2]
        cols = []
        for i in range(POOL_OUT):
            s = (i * L) // POOL_OUT
            e = -(-((i + 1) * L) // POOL_OUT)
            cols.append(jnp.max(r[:, :, s:e], axis=2))
        return jnp.stack(cols, axis=2)                       # (N, 2, 30)

    o1 = pool(conv_relu(params["w1"], params["b1"])).reshape(N, -1)
    o3 = pool(conv_relu(params["w3"], params["b3"])).reshape(N, -1)
    feat = jnp.concatenate([o1, o1, o3], axis=1)             # out2 == out1
    return feat @ params["fc_w"].T + params["fc_b"]


if __name__ == "__main__":
    D = 16   # embed_dim
    H = 16   # sequence length (conv height)
    N = 2    # batch

    key = jax.random.PRNGKey(0)
    kx, k0, k1, k2, k3, k4, k5, k6, k7 = jax.random.split(key, 9)

    def uinit(k, shape, fan_in):
        bound = 1.0 / np.sqrt(fan_in)
        return jax.random.uniform(k, shape, jnp.float32, -bound, bound)

    params = {
        "w1": uinit(k0, (2, 1, 4, D), 4 * D), "b1": uinit(k1, (2,), 4 * D),
        "w2": uinit(k2, (2, 1, 3, D), 3 * D), "b2": uinit(k3, (2,), 3 * D),
        "w3": uinit(k4, (2, 1, 2, D), 2 * D), "b3": uinit(k5, (2,), 2 * D),
        "fc_w": uinit(k6, (9, 3 * 2 * POOL_OUT), 180),
        "fc_b": uinit(k7, (9,), 180),
    }
    x = jax.random.normal(kx, (N, 1, H, D), jnp.float32)

    out = cnn_forward(x, params)
    out = jax.block_until_ready(out)

    ref = reference_forward(x, params)
    np.testing.assert_allclose(np.asarray(out), np.asarray(ref),
                               rtol=1e-4, atol=1e-4)
    print("KERNEL_OK")
</pallas_src>

<mosaic_0001>
module attributes {stable_mosaic.version = 11 : i64} {
  func.func @cnn_kernel(%arg0: memref<2x18x16xf32, #tpu.memory_space<vmem>>, %arg1: memref<64x120xf32, #tpu.memory_space<vmem>>, %arg2: memref<1x120xf32, #tpu.memory_space<vmem>>, %arg3: memref<15x120xf32, #tpu.memory_space<vmem>>, %arg4: memref<120x9xf32, #tpu.memory_space<vmem>>, %arg5: memref<1x9xf32, #tpu.memory_space<vmem>>, %arg6: memref<2x9xf32, #tpu.memory_space<vmem>>) attributes {dimension_semantics = [], scalar_prefetch = 0 : i64, scratch_operands = 0 : i64, tpu.core_type = #tpu.core_type<tc>} {
    %c0 = arith.constant 0 : index
    %c0_0 = arith.constant 0 : index
    %c0_1 = arith.constant 0 : index
    %0 = vector.load %arg0[%c0, %c0_0, %c0_1] : memref<2x18x16xf32, #tpu.memory_space<vmem>>, vector<2x18x16xf32>
    %c0_2 = arith.constant 0 : index
    %c0_3 = arith.constant 0 : index
    %1 = vector.load %arg1[%c0_2, %c0_3] : memref<64x120xf32, #tpu.memory_space<vmem>>, vector<64x120xf32>
    %c0_4 = arith.constant 0 : index
    %c0_5 = arith.constant 0 : index
    %2 = vector.load %arg2[%c0_4, %c0_5] : memref<1x120xf32, #tpu.memory_space<vmem>>, vector<1x120xf32>
    %c0_6 = arith.constant 0 : index
    %c0_7 = arith.constant 0 : index
    %3 = vector.load %arg3[%c0_6, %c0_7] : memref<15x120xf32, #tpu.memory_space<vmem>>, vector<15x120xf32>
    %4 = vector.extract_strided_slice %0 {offsets = [0, 0, 0], sizes = [1, 18, 16], strides = [1, 1, 1]} : vector<2x18x16xf32> to vector<1x18x16xf32>
    %5 = vector.shape_cast %4 : vector<1x18x16xf32> to vector<18x16xf32>
    %6 = vector.extract_strided_slice %5 {offsets = [0, 0], sizes = [15, 16], strides = [1, 1]} : vector<18x16xf32> to vector<15x16xf32>
    %7 = vector.extract_strided_slice %5 {offsets = [1, 0], sizes = [15, 16], strides = [1, 1]} : vector<18x16xf32> to vector<15x16xf32>
    %8 = vector.extract_strided_slice %5 {offsets = [2, 0], sizes = [15, 16], strides = [1, 1]} : vector<18x16xf32> to vector<15x16xf32>
    %9 = vector.extract_strided_slice %5 {offsets = [3, 0], sizes = [15, 16], strides = [1, 1]} : vector<18x16xf32> to vector<15x16xf32>
    %10 = tpu.concatenate %6, %7, %8, %9 in 1 : vector<15x16xf32>, vector<15x16xf32>, vector<15x16xf32>, vector<15x16xf32> -> vector<15x64xf32>
    %cst = arith.constant dense<0.000000e+00> : vector<15x120xf32>
    %11 = tpu.matmul %10, %1, %cst {dimension_numbers = #tpu.dot_dimension_numbers<[1], [0], [0], [1], [0, 0, 1, 1], [], []>} : vector<15x64xf32>, vector<64x120xf32>, vector<15x120xf32> -> vector<15x120xf32>
    %12 = vector.broadcast %2 : vector<1x120xf32> to vector<15x120xf32>
    %13 = arith.addf %11, %12 : vector<15x120xf32>
    %cst_8 = arith.constant 0.000000e+00 : f32
    %14 = vector.broadcast %cst_8 : f32 to vector<15x120xf32>
    %15 = arith.maximumf %13, %14 : vector<15x120xf32>
    %16 = arith.addf %15, %3 : vector<15x120xf32>
    %cst_9 = arith.constant dense<0xFF800000> : vector<120xf32>
    %17 = vector.multi_reduction <maximumf>, %16, %cst_9 [0] : vector<15x120xf32> to vector<120xf32>
    %18 = vector.shape_cast %17 : vector<120xf32> to vector<1x120xf32>
    %19 = vector.extract_strided_slice %0 {offsets = [1, 0, 0], sizes = [1, 18, 16], strides = [1, 1, 1]} : vector<2x18x16xf32> to vector<1x18x16xf32>
    %20 = vector.shape_cast %19 : vector<1x18x16xf32> to vector<18x16xf32>
    %21 = vector.extract_strided_slice %20 {offsets = [0, 0], sizes = [15, 16], strides = [1, 1]} : vector<18x16xf32> to vector<15x16xf32>
    %22 = vector.extract_strided_slice %20 {offsets = [1, 0], sizes = [15, 16], strides = [1, 1]} : vector<18x16xf32> to vector<15x16xf32>
    %23 = vector.extract_strided_slice %20 {offsets = [2, 0], sizes = [15, 16], strides = [1, 1]} : vector<18x16xf32> to vector<15x16xf32>
    %24 = vector.extract_strided_slice %20 {offsets = [3, 0], sizes = [15, 16], strides = [1, 1]} : vector<18x16xf32> to vector<15x16xf32>
    %25 = tpu.concatenate %21, %22, %23, %24 in 1 : vector<15x16xf32>, vector<15x16xf32>, vector<15x16xf32>, vector<15x16xf32> -> vector<15x64xf32>
    %cst_10 = arith.constant dense<0.000000e+00> : vector<15x120xf32>
    %26 = tpu.matmul %25, %1, %cst_10 {dimension_numbers = #tpu.dot_dimension_numbers<[1], [0], [0], [1], [0, 0, 1, 1], [], []>} : vector<15x64xf32>, vector<64x120xf32>, vector<15x120xf32> -> vector<15x120xf32>
    %27 = vector.broadcast %2 : vector<1x120xf32> to vector<15x120xf32>
    %28 = arith.addf %26, %27 : vector<15x120xf32>
    %cst_11 = arith.constant 0.000000e+00 : f32
    %29 = vector.broadcast %cst_11 : f32 to vector<15x120xf32>
    %30 = arith.maximumf %28, %29 : vector<15x120xf32>
    %31 = arith.addf %30, %3 : vector<15x120xf32>
    %cst_12 = arith.constant dense<0xFF800000> : vector<120xf32>
    %32 = vector.multi_reduction <maximumf>, %31, %cst_12 [0] : vector<15x120xf32> to vector<120xf32>
    %33 = vector.shape_cast %32 : vector<120xf32> to vector<1x120xf32>
    %34 = tpu.concatenate %18, %33 in 0 : vector<1x120xf32>, vector<1x120xf32> -> vector<2x120xf32>
    %c0_13 = arith.constant 0 : index
    %c0_14 = arith.constant 0 : index
    %35 = vector.load %arg4[%c0_13, %c0_14] : memref<120x9xf32, #tpu.memory_space<vmem>>, vector<120x9xf32>
    %cst_15 = arith.constant dense<0.000000e+00> : vector<2x9xf32>
    %36 = tpu.matmul %34, %35, %cst_15 {dimension_numbers = #tpu.dot_dimension_numbers<[1], [0], [0], [1], [0, 0, 1, 1], [], []>} : vector<2x120xf32>, vector<120x9xf32>, vector<2x9xf32> -> vector<2x9xf32>
    %c0_16 = arith.constant 0 : index
    %c0_17 = arith.constant 0 : index
    %37 = vector.load %arg5[%c0_16, %c0_17] : memref<1x9xf32, #tpu.memory_space<vmem>>, vector<1x9xf32>
    %38 = vector.broadcast %37 : vector<1x9xf32> to vector<2x9xf32>
    %39 = arith.addf %36, %38 : vector<2x9xf32>
    %c0_18 = arith.constant 0 : index
    %c0_19 = arith.constant 0 : index
    %40 = vector.load %arg6[%c0_18, %c0_19] : memref<2x9xf32, #tpu.memory_space<vmem>>, vector<2x9xf32>
    tpu.vector_store %arg6[%c0_18, %c0_19], %39 {strides = array<i32>} : memref<2x9xf32, #tpu.memory_space<vmem>>, vector<2x9xf32>,
    return
  }
}

</mosaic_0001>

<llo_original>
// kernel: tpu_custom_call.1
$region0: #{tpu_custom_call.1}
  #allocation0 [shape = 'u32[]', space=smem, size = 0x4, offset = 0x4, fixed_abs, tag = 'smem constant byte address 0x4 - core index']
  #allocation1 [shape = 'u32[144,128]{1,0:T(1,128)}', space=vmem, size = 0x12000, scoped, tag = 'internal scratch']
  %s0 = inlined_call_operand.vmem [shape: f32[2,18,16], index: 0, kind: input, shape index: {}]
  %s1 = inlined_call_operand.vmem [shape: f32[64,120], index: 1, kind: input, shape index: {}]
  %s2 = inlined_call_operand.vmem [shape: f32[1,120], index: 2, kind: input, shape index: {}]
  %s3 = inlined_call_operand.vmem [shape: f32[15,120], index: 3, kind: input, shape index: {}]
  %s4 = inlined_call_operand.vmem [shape: f32[120,9], index: 4, kind: input, shape index: {}]
  %s5 = inlined_call_operand.vmem [shape: f32[1,9], index: 5, kind: input, shape index: {}]
  %s6 = inlined_call_operand.hbm [shape: f32[2,9], index: 6, kind: output, shape index: {}]
  %s7 = sld [smem:[#allocation0]]
  $region34: #{tpu_custom_call.1} parent=0
    _
  %s9 = ssub.s32 1, %s7
  %s10 = scalar_select 0, %s9, %s7
  $region1: #{tpu_custom_call.1} parent=0
    #allocation2 [shape = 'u8[1024]{0}', space=vmem, size = 0x400, scoped, tag = 'output window, operand 0, single buffered']
    #allocation3 [shape = 's32[1]{0}', space=sflag, size = 0x4, scoped, tag = 'scoped memory for tpu_custom_call.1']
    %11 = vsyncpa [#allocation3], 0
    // Predicated region
    $region2: #{tpu_custom_call.1} parent=1 // pred_check
      _
    $region3: #{tpu_custom_call.1} parent=1 // pred_check_branch
      %13 = sbr.rel (0) target = $region5
    $region4: #{tpu_custom_call.1} parent=1 // pred_region
      _
    $region5: #{tpu_custom_call.1} parent=1 // pred_fallthru
      _
    // Predicated region
    $region6: #{tpu_custom_call.1} parent=1 // pred_check
      _
    $region7: #{tpu_custom_call.1} parent=1 // pred_check_branch
      %15 = sbr.rel (0) target = $region9
    $region8: #{tpu_custom_call.1} parent=1 // pred_region
      _
    $region9: #{tpu_custom_call.1} parent=1 // pred_fallthru
      _
    // Predicated region
    $region10: #{tpu_custom_call.1} parent=1 // pred_check
      _
    $region11: #{tpu_custom_call.1} parent=1 // pred_check_branch
      %17 = sbr.rel (0) target = $region13
    $region12: #{tpu_custom_call.1} parent=1 // pred_region
      _
    $region13: #{tpu_custom_call.1} parent=1 // pred_fallthru
      _
    // Predicated region
    $region14: #{tpu_custom_call.1} parent=1 // pred_check
      _
    $region15: #{tpu_custom_call.1} parent=1 // pred_check_branch
      %19 = sbr.rel (0) target = $region17
    $region16: #{tpu_custom_call.1} parent=1 // pred_region
      _
    $region17: #{tpu_custom_call.1} parent=1 // pred_fallthru
      _
    // Predicated region
    $region18: #{tpu_custom_call.1} parent=1 // pred_check
      _
    $region19: #{tpu_custom_call.1} parent=1 // pred_check_branch
      %21 = sbr.rel (0) target = $region21
    $region20: #{tpu_custom_call.1} parent=1 // pred_region
      _
    $region21: #{tpu_custom_call.1} parent=1 // pred_fallthru
      _
    // Predicated region
    $region22: #{tpu_custom_call.1} parent=1 // pred_check
      _
    $region23: #{tpu_custom_call.1} parent=1 // pred_check_branch
      %23 = sbr.rel (0) target = $region25
    $region24: #{tpu_custom_call.1} parent=1 // pred_region
      _
    $region25: #{tpu_custom_call.1} parent=1 // pred_fallthru
      _
    %v24 = vld [vmem:[%s0] sm:$0xff]
    %v25 = vld [vmem:[%s0 + $0x8] sm:$0xff]
    %v26 = vld [vmem:[%s0 + $0x10] sm:$0x3]
    %v27 = vld [vmem:[%s0 + $0x18] sm:$0xff]
    %v28 = vld [vmem:[%s0 + $0x20] sm:$0xff]
    %v29 = vld [vmem:[%s0 + $0x28] sm:$0x3]
    %v30 = vld [vmem:[%s1] sm:$0xff]
    %v31 = vld [vmem:[%s1 + $0x8] sm:$0xff]
    %v32 = vld [vmem:[%s1 + $0x10] sm:$0xff]
    %v33 = vld [vmem:[%s1 + $0x18] sm:$0xff]
    %v34 = vld [vmem:[%s1 + $0x20] sm:$0xff]
    %v35 = vld [vmem:[%s1 + $0x28] sm:$0xff]
    %v36 = vld [vmem:[%s1 + $0x30] sm:$0xff]
    %v37 = vld [vmem:[%s1 + $0x38] sm:$0xff]
    %v38 = vld [vmem:[%s2] sm:$0x1]
    %v39 = vld [vmem:[%s3] sm:$0xff]
    %v40 = vld [vmem:[%s3 + $0x8] sm:$0x7f]
    %vm43 = vcmask 1046528
    %v44 = vrot.slane %v24, 1
    %v45 = vrot.slane %v25, 1
    %v46 = vsel %vm43, %v44, %v45
    %47 = vrot.lane.b32.xlu0 %v46, 16
    %v48 = vpop.permute.xlu0 %47
    %49 = vrot.lane.b32.xlu0 %v45, 16
    %v50 = vpop.permute.xlu0 %49
    %vm54 = vcmask 1045504
    %v55 = vrot.slane %v24, 2
    %v56 = vrot.slane %v25, 2
    %v57 = vsel %vm54, %v55, %v56
    %v58 = vrot.slane %v26, 2
    %v59 = vsel %vm54, %v56, %v58
    %60 = vrot.lane.b32.xlu0 %v57, 32
    %v61 = vpop.permute.xlu0 %60
    %62 = vrot.lane.b32.xlu0 %v59, 32
    %v63 = vpop.permute.xlu0 %62
    %vm66 = vcmask 1044480
    %v67 = vrot.slane %v24, 3
    %v68 = vrot.slane %v25, 3
    %v69 = vsel %vm66, %v67, %v68
    %v70 = vrot.slane %v26, 3
    %v71 = vsel %vm66, %v68, %v70
    %72 = vrot.lane.b32.xlu0 %v69, 48
    %v73 = vpop.permute.xlu0 %72
    %74 = vrot.lane.b32.xlu0 %v71, 48
    %v75 = vpop.permute.xlu0 %74
    %vm78 = vcmask 130048
    %v79 = vsel %vm78, %v24, %v48
    %v80 = vsel %vm78, %v25, %v50
    %vm81 = vcmask 261120
    %v82 = vsel %vm81, %v79, %v61
    %v83 = vsel %vm81, %v80, %v63
    %vm84 = vcmask 392192
    %v85 = vsel %vm84, %v82, %v73
    %v86 = vsel %vm84, %v83, %v75
    %v88 = vlaneseq
    %v89 = vshrl.u32 %v88, 7
    %v90 = vsub.s32 0, %v89
    %v91 = vrot.slane %v38, %v90
    %vm93 = vcmask 523264
    %v95 = vsel %vm93, %v85, 0
    %v98 = vsel %vm93, %v86, 0
    %100 = vmatprep.subr.mxu0 0.0
    %101 = vmatpush1.msra.mxu0 %v30
    %102 = vmatprep.subr.mxu0 0.0
    %103 = vmatpush1.msra.mxu0 %v31
    %104 = vmatprep.subr.mxu0 0.0
    %105 = vmatpush1.msra.mxu0 %v32
    %106 = vmatprep.subr.mxu0 0.0
    %107 = vmatpush1.msra.mxu0 %v33
    %108 = vmatprep.subr.mxu0 0.0
    %109 = vmatpush1.msra.mxu0 %v34
    %110 = vmatprep.subr.mxu0 0.0
    %111 = vmatpush1.msra.mxu0 %v35
    %112 = vmatprep.subr.mxu0 0.0
    %113 = vmatpush1.msra.mxu0 %v36
    %114 = vmatprep.subr.mxu0 0.0
    %115 = vmatpush1.msra.mxu0 %v37
    %116 = vmatprep.subr.mxu0 0.0
    %117 = vmatpush1.msra.mxu0 0.0
    %118 = vmatprep.subr.mxu0 0.0
    %119 = vmatpush1.msra.mxu0 0.0
    %120 = vmatprep.subr.mxu0 0.0
    %121 = vmatpush1.msra.mxu0 0.0
    %122 = vmatprep.subr.mxu0 0.0
    %123 = vmatpush1.msra.mxu0 0.0
    %124 = vmatprep.subr.mxu0 0.0
    %125 = vmatpush1.msra.mxu0 0.0
    %126 = vmatprep.subr.mxu0 0.0
    %127 = vmatpush1.msra.mxu0 0.0
    %128 = vmatprep.subr.mxu0 0.0
    %129 = vmatpush1.msra.mxu0 0.0
    %130 = vmatprep.subr.mxu0 0.0
    %131 = vmatpush1.msra.mxu0 0.0
    %132 = vmatprep.subr.mxu0 0.0
    %133 = vmatpush1.msra.mxu0 0.0
    %134 = vmatprep.subr.mxu0 0.0
    %135 = vmatpush1.msra.mxu0 0.0
    %136 = vmatprep.subr.mxu0 0.0
    %137 = vmatpush1.msra.mxu0 0.0
    %138 = vmatprep.subr.mxu0 0.0
    %139 = vmatpush1.msra.mxu0 0.0
    %140 = vmatprep.subr.mxu0 0.0
    %141 = vmatpush1.msra.mxu0 0.0
    %142 = vmatprep.subr.mxu0 0.0
    %143 = vmatpush1.msra.mxu0 0.0
    %144 = vmatprep.subr.mxu0 0.0
    %145 = vmatpush1.msra.mxu0 0.0
    %146 = vmatprep.subr.mxu0 0.0
    %147 = vmatpush1.msra.mxu0 0.0
    %148 = vmatprep.subr.mxu0 0.0
    %149 = vmatpush1.msra.mxu0 0.0
    %150 = vmatprep.subr.mxu0 0.0
    %151 = vmatpush1.msra.mxu0 0.0
    %152 = vmatprep.subr.mxu0 0.0
    %153 = vmatpush1.msra.mxu0 0.0
    %154 = vmatprep.subr.mxu0 0.0
    %155 = vmatpush1.msra.mxu0 0.0
    %156 = vmatprep.subr.mxu0 0.0
    %157 = vmatpush1.msra.mxu0 0.0
    %158 = vmatprep.subr.mxu0 0.0
    %159 = vmatpush1.msra.mxu0 0.0
    %160 = vmatprep.subr.mxu0 0.0
    %161 = vmatpush1.msra.mxu0 0.0
    %162 = vmatprep.subr.mxu0 0.0
    %163 = vmatpush1.msra.mxu0 0.0
    %164 = vmatprep.mubr.f32.mxu0 0.0
    %165 = vmatmul.mubr.f32.gmra.mrb[0].mxu0 %v95
    %v166 = vpop.f32.mrb[0].mxu0
    %v167 = vadd.f32 %v91, %v166
    %v168 = vpop.f32.mrb[0].mxu0
    %169 = vmatprep.mubr.f32.mxu0 0.0
    %170 = vmatmul.mubr.f32.gmra.mrb[0].mxu0 %v98
    %v171 = vpop.f32.mrb[0].mxu0
    %v172 = vadd.f32 %v91, %v171
    %v173 = vpop.f32.mrb[0].mxu0
    %174 = vdwg.mxu0
    %v175 = vmax.f32 %v167, 0.0
    %v176 = vmax.f32 %v172, 0.0
    %v177 = vadd.f32 %v175, %v39
    %v178 = vadd.f32 %v176, %v40
    %vm179 = vcmask 982016
    %v180 = vsel %vm179, %v177, -inf
    %vm181 = vcmask 980992
    %v182 = vsel %vm181, %v178, -inf
    %v183 = vmax.f32 %v180, %v182
    %v184 = vrot.slane %v183, 4
    %v185 = vmax.f32 %v183, %v184
    %v186 = vrot.slane %v185, 2
    %v187 = vmax.f32 %v185, %v186
    %v188 = vrot.slane %v187, 1
    %v189 = vmax.f32 %v187, %v188
    %v192 = vrot.slane %v27, 1
    %v193 = vrot.slane %v28, 1
    %v194 = vsel %vm43, %v192, %v193
    %195 = vrot.lane.b32.xlu0 %v194, 16
    %v196 = vpop.permute.xlu0 %195
    %197 = vrot.lane.b32.xlu0 %v193, 16
    %v198 = vpop.permute.xlu0 %197
    %v202 = vrot.slane %v27, 2
    %v203 = vrot.slane %v28, 2
    %v204 = vsel %vm54, %v202, %v203
    %v205 = vrot.slane %v29, 2
    %v206 = vsel %vm54, %v203, %v205
    %207 = vrot.lane.b32.xlu0 %v204, 32
    %v208 = vpop.permute.xlu0 %207
    %209 = vrot.lane.b32.xlu0 %v206, 32
    %v210 = vpop.permute.xlu0 %209
    %v213 = vrot.slane %v27, 3
    %v214 = vrot.slane %v28, 3
    %v215 = vsel %vm66, %v213, %v214
    %v216 = vrot.slane %v29, 3
    %v217 = vsel %vm66, %v214, %v216
    %218 = vrot.lane.b32.xlu0 %v215, 48
    %v219 = vpop.permute.xlu0 %218
    %220 = vrot.lane.b32.xlu0 %v217, 48
    %v221 = vpop.permute.xlu0 %220
    %v224 = vsel %vm78, %v27, %v196
    %v225 = vsel %vm78, %v28, %v198
    %v226 = vsel %vm81, %v224, %v208
    %v227 = vsel %vm81, %v225, %v210
    %v228 = vsel %vm84, %v226, %v219
    %v229 = vsel %vm84, %v227, %v221
    %v231 = vsel %vm93, %v228, 0
    %v234 = vsel %vm93, %v229, 0
    %236 = vmatprep.subr.mxu0 0.0
    %237 = vmatpush1.msra.mxu0 %v30
    %238 = vmatprep.subr.mxu0 0.0
    %239 = vmatpush1.msra.mxu0 %v31
    %240 = vmatprep.subr.mxu0 0.0
    %241 = vmatpush1.msra.mxu0 %v32
    %242 = vmatprep.subr.mxu0 0.0
    %243 = vmatpush1.msra.mxu0 %v33
    %244 = vmatprep.subr.mxu0 0.0
    %245 = vmatpush1.msra.mxu0 %v34
    %246 = vmatprep.subr.mxu0 0.0
    %247 = vmatpush1.msra.mxu0 %v35
    %248 = vmatprep.subr.mxu0 0.0
    %249 = vmatpush1.msra.mxu0 %v36
    %250 = vmatprep.subr.mxu0 0.0
    %251 = vmatpush1.msra.mxu0 %v37
    %252 = vmatprep.subr.mxu0 0.0
    %253 = vmatpush1.msra.mxu0 0.0
    %254 = vmatprep.subr.mxu0 0.0
    %255 = vmatpush1.msra.mxu0 0.0
    %256 = vmatprep.subr.mxu0 0.0
    %257 = vmatpush1.msra.mxu0 0.0
    %258 = vmatprep.subr.mxu0 0.0
    %259 = vmatpush1.msra.mxu0 0.0
    %260 = vmatprep.subr.mxu0 0.0
    %261 = vmatpush1.msra.mxu0 0.0
    %262 = vmatprep.subr.mxu0 0.0
    %263 = vmatpush1.msra.mxu0 0.0
    %264 = vmatprep.subr.mxu0 0.0
    %265 = vmatpush1.msra.mxu0 0.0
    %266 = vmatprep.subr.mxu0 0.0
    %267 = vmatpush1.msra.mxu0 0.0
    %268 = vmatprep.subr.mxu0 0.0
    %269 = vmatpush1.msra.mxu0 0.0
    %270 = vmatprep.subr.mxu0 0.0
    %271 = vmatpush1.msra.mxu0 0.0
    %272 = vmatprep.subr.mxu0 0.0
    %273 = vmatpush1.msra.mxu0 0.0
    %274 = vmatprep.subr.mxu0 0.0
    %275 = vmatpush1.msra.mxu0 0.0
    %276 = vmatprep.subr.mxu0 0.0
    %277 = vmatpush1.msra.mxu0 0.0
    %278 = vmatprep.subr.mxu0 0.0
    %279 = vmatpush1.msra.mxu0 0.0
    %280 = vmatprep.subr.mxu0 0.0
    %281 = vmatpush1.msra.mxu0 0.0
    %282 = vmatprep.subr.mxu0 0.0
    %283 = vmatpush1.msra.mxu0 0.0
    %284 = vmatprep.subr.mxu0 0.0
    %285 = vmatpush1.msra.mxu0 0.0
    %286 = vmatprep.subr.mxu0 0.0
    %287 = vmatpush1.msra.mxu0 0.0
    %288 = vmatprep.subr.mxu0 0.0
    %289 = vmatpush1.msra.mxu0 0.0
    %290 = vmatprep.subr.mxu0 0.0
    %291 = vmatpush1.msra.mxu0 0.0
    %292 = vmatprep.subr.mxu0 0.0
    %293 = vmatpush1.msra.mxu0 0.0
    %294 = vmatprep.subr.mxu0 0.0
    %295 = vmatpush1.msra.mxu0 0.0
    %296 = vmatprep.subr.mxu0 0.0
    %297 = vmatpush1.msra.mxu0 0.0
    %298 = vmatprep.subr.mxu0 0.0
    %299 = vmatpush1.msra.mxu0 0.0
    %300 = vmatprep.mubr.f32.mxu0 0.0
    %301 = vmatmul.mubr.f32.gmra.mrb[0].mxu0 %v231
    %v302 = vpop.f32.mrb[0].mxu0
    %v303 = vadd.f32 %v91, %v302
    %v304 = vpop.f32.mrb[0].mxu0
    %305 = vmatprep.mubr.f32.mxu0 0.0
    %306 = vmatmul.mubr.f32.gmra.mrb[0].mxu0 %v234
    %v307 = vpop.f32.mrb[0].mxu0
    %v308 = vadd.f32 %v91, %v307
    %v309 = vpop.f32.mrb[0].mxu0
    %310 = vdwg.mxu0
    %v311 = vmax.f32 %v303, 0.0
    %v312 = vmax.f32 %v308, 0.0
    %v313 = vadd.f32 %v311, %v39
    %v314 = vadd.f32 %v312, %v40
    %v315 = vsel %vm179, %v313, -inf
    %v316 = vsel %vm181, %v314, -inf
    %v317 = vmax.f32 %v315, %v316
    %v318 = vrot.slane %v317, 4
    %v319 = vmax.f32 %v317, %v318
    %v320 = vrot.slane %v319, 2
    %v321 = vmax.f32 %v319, %v320
    %v322 = vrot.slane %v321, 1
    %v323 = vmax.f32 %v321, %v322
    %vm324 = vcmask 1040384
    %v325 = vsel %vm324, %v189, %v323
    %v326 = vld [vmem:[%s4] sm:$0xff]
    %v327 = vld [vmem:[%s4 + $0x8] sm:$0xff]
    %v328 = vld [vmem:[%s4 + $0x10] sm:$0xff]
    %v329 = vld [vmem:[%s4 + $0x18] sm:$0xff]
    %v330 = vld [vmem:[%s4 + $0x20] sm:$0xff]
    %v331 = vld [vmem:[%s4 + $0x28] sm:$0xff]
    %v332 = vld [vmem:[%s4 + $0x30] sm:$0xff]
    %v333 = vld [vmem:[%s4 + $0x38] sm:$0xff]
    %v334 = vld [vmem:[%s4 + $0x40] sm:$0xff]
    %v335 = vld [vmem:[%s4 + $0x48] sm:$0xff]
    %v336 = vld [vmem:[%s4 + $0x50] sm:$0xff]
    %v337 = vld [vmem:[%s4 + $0x58] sm:$0xff]
    %v338 = vld [vmem:[%s4 + $0x60] sm:$0xff]
    %v339 = vld [vmem:[%s4 + $0x68] sm:$0xff]
    %v340 = vld [vmem:[%s4 + $0x70] sm:$0xff]
    %v341 = vld [vmem:[%s5] sm:$0x1]
    %v343 = vlaneseq
    %v344 = vshrl.u32 %v343, 7
    %v345 = vsub.s32 0, %v344
    %v346 = vrot.slane %v341, %v345
    %v349 = vsel %vm179, %v325, 0
    %351 = vmatprep.subr.mxu0 0.0
    %352 = vmatpush1.msra.mxu0 %v326
    %353 = vmatprep.subr.mxu0 0.0
    %354 = vmatpush1.msra.mxu0 %v327
    %355 = vmatprep.subr.mxu0 0.0
    %356 = vmatpush1.msra.mxu0 %v328
    %357 = vmatprep.subr.mxu0 0.0
    %358 = vmatpush1.msra.mxu0 %v329
    %359 = vmatprep.subr.mxu0 0.0
    %360 = vmatpush1.msra.mxu0 %v330
    %361 = vmatprep.subr.mxu0 0.0
    %362 = vmatpush1.msra.mxu0 %v331
    %363 = vmatprep.subr.mxu0 0.0
    %364 = vmatpush1.msra.mxu0 %v332
    %365 = vmatprep.subr.mxu0 0.0
    %366 = vmatpush1.msra.mxu0 %v333
    %367 = vmatprep.subr.mxu0 0.0
    %368 = vmatpush1.msra.mxu0 %v334
    %369 = vmatprep.subr.mxu0 0.0
    %370 = vmatpush1.msra.mxu0 %v335
    %371 = vmatprep.subr.mxu0 0.0
    %372 = vmatpush1.msra.mxu0 %v336
    %373 = vmatprep.subr.mxu0 0.0
    %374 = vmatpush1.msra.mxu0 %v337
    %375 = vmatprep.subr.mxu0 0.0
    %376 = vmatpush1.msra.mxu0 %v338
    %377 = vmatprep.subr.mxu0 0.0
    %378 = vmatpush1.msra.mxu0 %v339
    %379 = vmatprep.subr.mxu0 0.0
    %380 = vmatpush1.msra.mxu0 %v340
    %381 = vmatprep.subr.mxu0 0.0
    %382 = vmatpush1.msra.mxu0 0.0
    %383 = vmatprep.subr.mxu0 0.0
    %384 = vmatpush1.msra.mxu0 0.0
    %385 = vmatprep.subr.mxu0 0.0
    %386 = vmatpush1.msra.mxu0 0.0
    %387 = vmatprep.subr.mxu0 0.0
    %388 = vmatpush1.msra.mxu0 0.0
    %389 = vmatprep.subr.mxu0 0.0
    %390 = vmatpush1.msra.mxu0 0.0
    %391 = vmatprep.subr.mxu0 0.0
    %392 = vmatpush1.msra.mxu0 0.0
    %393 = vmatprep.subr.mxu0 0.0
    %394 = vmatpush1.msra.mxu0 0.0
    %395 = vmatprep.subr.mxu0 0.0
    %396 = vmatpush1.msra.mxu0 0.0
    %397 = vmatprep.subr.mxu0 0.0
    %398 = vmatpush1.msra.mxu0 0.0
    %399 = vmatprep.subr.mxu0 0.0
    %400 = vmatpush1.msra.mxu0 0.0
    %401 = vmatprep.subr.mxu0 0.0
    %402 = vmatpush1.msra.mxu0 0.0
    %403 = vmatprep.subr.mxu0 0.0
    %404 = vmatpush1.msra.mxu0 0.0
    %405 = vmatprep.subr.mxu0 0.0
    %406 = vmatpush1.msra.mxu0 0.0
    %407 = vmatprep.subr.mxu0 0.0
    %408 = vmatpush1.msra.mxu0 0.0
    %409 = vmatprep.subr.mxu0 0.0
    %410 = vmatpush1.msra.mxu0 0.0
    %411 = vmatprep.subr.mxu0 0.0
    %412 = vmatpush1.msra.mxu0 0.0
    %413 = vmatprep.subr.mxu0 0.0
    %414 = vmatpush1.msra.mxu0 0.0
    %415 = vmatprep.mubr.f32.mxu0 0.0
    %416 = vmatmul.mubr.f32.gmra.mrb[0].mxu0 %v349
    %v417 = vpop.f32.mrb[0].mxu0
    %v418 = vadd.f32 %v346, %v417
    %v419 = vpop.f32.mrb[0].mxu0
    %420 = vdwg.mxu0
    %vm421 = vcmask 66560
    %422 = vst.msk [vmem:[#allocation2] sm:$0x3] %vm421, %v418
    // Predicated region
    $region26: #{tpu_custom_call.1} parent=1 // pred_check
      _
    $region27: #{tpu_custom_call.1} parent=1 // pred_check_branch
      %424 = sbr.rel (0) target = $region29
    $region28: #{tpu_custom_call.1} parent=1 // pred_region
      %s426 = ssub.s32 32, 32
      %427 = vsyncadd [#allocation3], %s426
      %s429 = sshll.u32 [#allocation2], 4
      %s430 = int_to_ptr.vmem [resolvable:$true] %s429
      %432 = dma.vmem_to_hbm [thread:$0]  %s430, 32, %s6, [#allocation3]
    $region29: #{tpu_custom_call.1} parent=1 // pred_fallthru
      _
    // Predicated region
    $region30: #{tpu_custom_call.1} parent=1 // pred_check
      _
    $region31: #{tpu_custom_call.1} parent=1 // pred_check_branch
      %434 = sbr.rel (0) target = $region33
    $region32: #{tpu_custom_call.1} parent=1 // pred_region
      %435 = dma.done [#allocation3], 32
    $region33: #{tpu_custom_call.1} parent=1 // pred_fallthru
      _
    %436 = vsyncpa [#allocation3], 1

</llo_original>
